<compile_context>
chip_gen: v7x
topology: tpu7x:2x2x1
jax: 0.10.0
libtpu: 0.0.40
codegen_flags: <defaults>
</compile_context>

<pallas_src>
import jax
import jax.numpy as jnp
from jax.experimental import pallas as pl
from jax.experimental.pallas import tpu as pltpu


def _round_up(x, m):
    return (x + m - 1) // m * m


def _pad_to(a, shape):
    pads = [(0, s - d) for d, s in zip(a.shape, shape)]
    return jnp.pad(a, pads)


# ----------------------- Phase 1: hoisted projections ------------------------
def projection_kernel(x_ref, m_ref,
                      wcx_ref, wcm_ref, bc_ref,
                      wi4_ref, bi4_ref,
                      proj_ref):
    f32 = jnp.float32
    comb = (jnp.dot(x_ref[...], wcx_ref[...], preferred_element_type=f32)
            + jnp.dot(m_ref[...], wcm_ref[...], preferred_element_type=f32)
            + bc_ref[...])
    # Single fused projection: [gates_r | gates_z | gates_n | out_base]
    proj_ref[...] = (jnp.dot(comb, wi4_ref[...], preferred_element_type=f32)
                     + bi4_ref[...])


# --------------------- Phase 2: sequential recurrence -------------------------
def recurrent_kernel(proj_ref, mask_ref, h0_ref,
                     wh3_ref, bh3_ref, w2h_ref,
                     out_ref, hxo_ref, h_s):
    f32 = jnp.float32
    Hp = w2h_ref.shape[0]
    Tt = proj_ref.shape[0]

    # Initialize the carried hidden state on the first time block.
    @pl.when(pl.program_id(0) == 0)
    def _():
        h_s[...] = h0_ref[...].astype(f32)

    # Hoist resident weight loads out of the inner (unrolled) loop.
    wh3 = wh3_ref[...]     # (Hp, 3Hp)  = [Whr | Whz | Whn]
    bh3 = bh3_ref[...]     # (1, 3Hp)
    w2h = w2h_ref[...]     # (Hp, Hp)

    def step(tt, h):
        g = proj_ref[tt]                          # (Bp, 4Hp): input gates + out_base
        hh = jnp.dot(h, wh3, preferred_element_type=f32) + bh3
        r = jax.nn.sigmoid(g[:, :Hp] + hh[:, :Hp])
        z = jax.nn.sigmoid(g[:, Hp:2 * Hp] + hh[:, Hp:2 * Hp])
        n = jnp.tanh(g[:, 2 * Hp:3 * Hp] + r * hh[:, 2 * Hp:3 * Hp])
        h_cand = (1.0 - z) * n + z * h
        mk = mask_ref[tt]                          # (Bp, 1) broadcasts over Hp
        h_new = h_cand * mk + h * (1.0 - mk)
        out_ref[tt] = (g[:, 3 * Hp:]
                       + jnp.dot(h_new, w2h, preferred_element_type=f32)
                       ).astype(out_ref.dtype)
        return h_new

    h_final = jax.lax.fori_loop(0, Tt, step, h_s[...], unroll=True)
    h_s[...] = h_final
    # Write the (resident) final-hx block every grid step for robustness.
    hxo_ref[...] = h_final.astype(hxo_ref.dtype)


# ------------------------------- Wrapper -------------------------------------
def modgru_forward(X, M, mask, hx, params, *, tt=32):
    T, B, D = X.shape
    H = hx.shape[-1]
    f32 = jnp.float32

    Bp = _round_up(B, 8)
    Dp = _round_up(D, 128)
    Hp = _round_up(H, 128)
    Tt = min(tt, T)
    Tp = _round_up(T, Tt)

    # ---- pad activations (zero padding is exact: padded weight rows are 0,
    #      padded timesteps carry mask=0 so h is unchanged) ----
    Xp = _pad_to(X.astype(f32), (Tp, Bp, Dp))
    Mp = _pad_to(M.astype(f32), (Tp, Bp, Dp))
    maskp = _pad_to(mask.astype(f32), (Tp, Bp))[..., None]     # (Tp, Bp, 1)
    hxp = _pad_to(hx.astype(f32), (Bp, Hp))

    # ---- pad + fuse weights ----
    wcx = _pad_to(params['wcx'], (Dp, Dp))
    wcm = _pad_to(params['wcm'], (Dp, Dp))
    bc = _pad_to(params['bc'], (1, Dp))
    # Input-side projections fused into one (Dp, 4Hp): [Wir | Wiz | Win | W2c]
    wi4 = jnp.concatenate([_pad_to(params['wir'], (Dp, Hp)),
                           _pad_to(params['wiz'], (Dp, Hp)),
                           _pad_to(params['win'], (Dp, Hp)),
                           _pad_to(params['w2c'], (Dp, Hp))], axis=1)
    bi4 = jnp.concatenate([_pad_to(params['bir'], (1, Hp)),
                           _pad_to(params['biz'], (1, Hp)),
                           _pad_to(params['bin'], (1, Hp)),
                           _pad_to(params['b2'], (1, Hp))], axis=1)
    # Hidden-side projections fused into one (Hp, 3Hp): [Whr | Whz | Whn]
    wh3 = jnp.concatenate([_pad_to(params['whr'], (Hp, Hp)),
                           _pad_to(params['whz'], (Hp, Hp)),
                           _pad_to(params['whn'], (Hp, Hp))], axis=1)
    bh3 = jnp.concatenate([_pad_to(params['bhr'], (1, Hp)),
                           _pad_to(params['bhz'], (1, Hp)),
                           _pad_to(params['bhn'], (1, Hp))], axis=1)
    w2h = _pad_to(params['w2h'], (Hp, Hp))

    # ---------------- Phase 1: hoisted projections (parallel) ----------------
    R = Tp * Bp                     # total rows
    Rt = Tt * Bp                    # rows per grid step
    X2 = Xp.reshape(R, Dp)
    M2 = Mp.reshape(R, Dp)

    p1_in_specs = [pl.BlockSpec((Rt, Dp), lambda i: (i, 0)),
                   pl.BlockSpec((Rt, Dp), lambda i: (i, 0))]
    for w in (wcx, wcm, bc, wi4, bi4):
        # Grid-invariant weights (same block index every step -> fetched once).
        # NOTE: at production sizes pass these bf16 / pipeline_mode=pl.Buffered(1)
        # to halve weight VMEM.
        p1_in_specs.append(pl.BlockSpec(w.shape, lambda i: (0, 0)))

    proj2 = pl.pallas_call(
        projection_kernel,
        grid_spec=pltpu.PrefetchScalarGridSpec(
            num_scalar_prefetch=0,
            grid=(R // Rt,),
            in_specs=p1_in_specs,
            out_specs=pl.BlockSpec((Rt, 4 * Hp), lambda i: (i, 0))),
        out_shape=jax.ShapeDtypeStruct((R, 4 * Hp), f32),
        compiler_params=pltpu.CompilerParams(
            dimension_semantics=("parallel",)),
    )(X2, M2, wcx, wcm, bc, wi4, bi4)

    proj = proj2.reshape(Tp, Bp, 4 * Hp)

    # ------------- Phase 2: sequential recurrence over time blocks -----------
    p2_in_specs = [
        pl.BlockSpec((Tt, Bp, 4 * Hp), lambda t: (t, 0, 0)),   # fused proj block
        pl.BlockSpec((Tt, Bp, 1), lambda t: (t, 0, 0)),        # mask block
        pl.BlockSpec((Bp, Hp), lambda t: (0, 0)),              # hx0 (resident)
    ]
    for w in (wh3, bh3, w2h):
        p2_in_specs.append(pl.BlockSpec(w.shape, lambda t: (0, 0)))

    out_p, hx_p = pl.pallas_call(
        recurrent_kernel,
        grid_spec=pltpu.PrefetchScalarGridSpec(
            num_scalar_prefetch=0,
            grid=(Tp // Tt,),
            in_specs=p2_in_specs,
            out_specs=[pl.BlockSpec((Tt, Bp, Hp), lambda t: (t, 0, 0)),
                       pl.BlockSpec((Bp, Hp), lambda t: (0, 0))],
            scratch_shapes=[pltpu.VMEM((Bp, Hp), f32)]),        # carried hidden
        out_shape=(jax.ShapeDtypeStruct((Tp, Bp, Hp), f32),
                   jax.ShapeDtypeStruct((Bp, Hp), f32)),
        compiler_params=pltpu.CompilerParams(
            dimension_semantics=("arbitrary",)),                # serial in time
    )(proj, maskp, hxp, wh3, bh3, w2h)

    return out_p[:T, :B, :H], hx_p[:B, :H]


# ----------------------- Pure-JAX reference (for check) ----------------------
def modgru_reference(X, M, mask, hx, p):
    def step(h, inp):
        x, m, mk = inp
        comb = x @ p['wcx'] + m @ p['wcm'] + p['bc']
        r = jax.nn.sigmoid(comb @ p['wir'] + p['bir'] + h @ p['whr'] + p['bhr'])
        z = jax.nn.sigmoid(comb @ p['wiz'] + p['biz'] + h @ p['whz'] + p['bhz'])
        n = jnp.tanh(comb @ p['win'] + p['bin'] + r * (h @ p['whn'] + p['bhn']))
        h_cand = (1.0 - z) * n + z * h
        mki = mk[:, None]
        h_new = h_cand * mki + h * (1.0 - mki)
        out = comb @ p['w2c'] + h_new @ p['w2h'] + p['b2']
        return h_new, out

    h_final, outs = jax.lax.scan(step, hx, (X, M, mask))
    return outs, h_final


# ------------------------------ Param init ------------------------------------
def init_params(key, D, H):
    """Deterministic synthetic parameters, pre-transposed so y = x @ W + b."""
    ks = jax.random.split(key, 18)
    u = lambda k, shape, bound: jax.random.uniform(
        k, shape, jnp.float32, -bound, bound)
    bD = 1.0 / jnp.sqrt(2.0 * D)
    bH = 1.0 / jnp.sqrt(float(H))
    b2 = 1.0 / jnp.sqrt(float(D + H))
    return {
        'wcx': u(ks[0], (D, D), bD), 'wcm': u(ks[1], (D, D), bD),
        'bc':  u(ks[2], (1, D), bD),
        'wir': u(ks[3], (D, H), bH), 'wiz': u(ks[4], (D, H), bH),
        'win': u(ks[5], (D, H), bH),
        'bir': u(ks[6], (1, H), bH), 'biz': u(ks[7], (1, H), bH),
        'bin': u(ks[8], (1, H), bH),
        'whr': u(ks[9], (H, H), bH), 'whz': u(ks[10], (H, H), bH),
        'whn': u(ks[11], (H, H), bH),
        'bhr': u(ks[12], (1, H), bH), 'bhz': u(ks[13], (1, H), bH),
        'bhn': u(ks[14], (1, H), bH),
        'w2c': u(ks[15], (D, H), b2), 'w2h': u(ks[16], (H, H), b2),
        'b2':  u(ks[17], (1, H), b2),
    }


# --------------------------------- Main ---------------------------------------
if __name__ == "__main__":
    T, B, D, H = 8, 4, 16, 32

    key = jax.random.PRNGKey(0)
    k_x, k_m, k_mask, k_h, k_p = jax.random.split(key, 5)

    X = jax.random.normal(k_x, (T, B, D), jnp.float32)
    M = jax.random.normal(k_m, (T, B, D), jnp.float32)
    mask = (jax.random.uniform(k_mask, (T, B)) > 0.3).astype(jnp.float32)
    hx0 = jax.random.normal(k_h, (B, H), jnp.float32)
    params = init_params(k_p, D, H)

    output, hx_final = modgru_forward(X, M, mask, hx0, params)
    output = jax.block_until_ready(output)
    hx_final = jax.block_until_ready(hx_final)

    ref_out, ref_hx = modgru_reference(X, M, mask, hx0, params)
    assert output.shape == (T, B, H) and hx_final.shape == (B, H)
    assert jnp.allclose(output, ref_out, atol=2e-5, rtol=2e-5)
    assert jnp.allclose(hx_final, ref_hx, atol=2e-5, rtol=2e-5)

    print("KERNEL_OK")
</pallas_src>

<mosaic_0001>
module attributes {stable_mosaic.version = 11 : i64} {
  func.func @projection_kernel(%arg0: i32, %arg1: memref<64x128xf32, #tpu.memory_space<vmem>>, %arg2: memref<64x128xf32, #tpu.memory_space<vmem>>, %arg3: memref<128x128xf32, #tpu.memory_space<vmem>>, %arg4: memref<128x128xf32, #tpu.memory_space<vmem>>, %arg5: memref<1x128xf32, #tpu.memory_space<vmem>>, %arg6: memref<128x512xf32, #tpu.memory_space<vmem>>, %arg7: memref<1x512xf32, #tpu.memory_space<vmem>>, %arg8: memref<64x512xf32, #tpu.memory_space<vmem>>) attributes {dimension_semantics = [#tpu.dimension_semantics<parallel>], iteration_bounds = array<i64: 1>, scalar_prefetch = 0 : i64, scratch_operands = 0 : i64, tpu.core_type = #tpu.core_type<tc>, window_params = [{transform_indices = @transform_0, window_bounds = array<i64: 64, 128>}, {transform_indices = @transform_1, window_bounds = array<i64: 64, 128>}, {pipeline_mode = #tpu.pipeline_mode<synchronous>, transform_indices = @transform_2, window_bounds = array<i64: 128, 128>}, {pipeline_mode = #tpu.pipeline_mode<synchronous>, transform_indices = @transform_3, window_bounds = array<i64: 128, 128>}, {pipeline_mode = #tpu.pipeline_mode<synchronous>, transform_indices = @transform_4, window_bounds = array<i64: 1, 128>}, {pipeline_mode = #tpu.pipeline_mode<synchronous>, transform_indices = @transform_5, window_bounds = array<i64: 128, 512>}, {pipeline_mode = #tpu.pipeline_mode<synchronous>, transform_indices = @transform_6, window_bounds = array<i64: 1, 512>}, {transform_indices = @transform_7, window_bounds = array<i64: 64, 512>}]} {
    %c0 = arith.constant 0 : index
    %c0_0 = arith.constant 0 : index
    %0 = vector.load %arg1[%c0, %c0_0] : memref<64x128xf32, #tpu.memory_space<vmem>>, vector<64x128xf32>
    %c0_1 = arith.constant 0 : index
    %c0_2 = arith.constant 0 : index
    %1 = vector.load %arg3[%c0_1, %c0_2] : memref<128x128xf32, #tpu.memory_space<vmem>>, vector<128x128xf32>
    %cst = arith.constant dense<0.000000e+00> : vector<64x128xf32>
    %2 = tpu.matmul %0, %1, %cst {dimension_numbers = #tpu.dot_dimension_numbers<[1], [0], [0], [1], [0, 0, 1, 1], [], []>} : vector<64x128xf32>, vector<128x128xf32>, vector<64x128xf32> -> vector<64x128xf32>
    %c0_3 = arith.constant 0 : index
    %c0_4 = arith.constant 0 : index
    %3 = vector.load %arg2[%c0_3, %c0_4] : memref<64x128xf32, #tpu.memory_space<vmem>>, vector<64x128xf32>
    %c0_5 = arith.constant 0 : index
    %c0_6 = arith.constant 0 : index
    %4 = vector.load %arg4[%c0_5, %c0_6] : memref<128x128xf32, #tpu.memory_space<vmem>>, vector<128x128xf32>
    %cst_7 = arith.constant dense<0.000000e+00> : vector<64x128xf32>
    %5 = tpu.matmul %3, %4, %cst_7 {dimension_numbers = #tpu.dot_dimension_numbers<[1], [0], [0], [1], [0, 0, 1, 1], [], []>} : vector<64x128xf32>, vector<128x128xf32>, vector<64x128xf32> -> vector<64x128xf32>
    %6 = arith.addf %2, %5 : vector<64x128xf32>
    %c0_8 = arith.constant 0 : index
    %c0_9 = arith.constant 0 : index
    %7 = vector.load %arg5[%c0_8, %c0_9] : memref<1x128xf32, #tpu.memory_space<vmem>>, vector<1x128xf32>
    %8 = vector.broadcast %7 : vector<1x128xf32> to vector<64x128xf32>
    %9 = arith.addf %6, %8 : vector<64x128xf32>
    %c0_10 = arith.constant 0 : index
    %c0_11 = arith.constant 0 : index
    %10 = vector.load %arg6[%c0_10, %c0_11] : memref<128x512xf32, #tpu.memory_space<vmem>>, vector<128x512xf32>
    %cst_12 = arith.constant dense<0.000000e+00> : vector<64x512xf32>
    %11 = tpu.matmul %9, %10, %cst_12 {dimension_numbers = #tpu.dot_dimension_numbers<[1], [0], [0], [1], [0, 0, 1, 1], [], []>} : vector<64x128xf32>, vector<128x512xf32>, vector<64x512xf32> -> vector<64x512xf32>
    %c0_13 = arith.constant 0 : index
    %c0_14 = arith.constant 0 : index
    %12 = vector.load %arg7[%c0_13, %c0_14] : memref<1x512xf32, #tpu.memory_space<vmem>>, vector<1x512xf32>
    %13 = vector.broadcast %12 : vector<1x512xf32> to vector<64x512xf32>
    %14 = arith.addf %11, %13 : vector<64x512xf32>
    %c0_15 = arith.constant 0 : index
    %c0_16 = arith.constant 0 : index
    %15 = vector.load %arg8[%c0_15, %c0_16] : memref<64x512xf32, #tpu.memory_space<vmem>>, vector<64x512xf32>
    tpu.vector_store %arg8[%c0_15, %c0_16], %14 {strides = array<i32>} : memref<64x512xf32, #tpu.memory_space<vmem>>, vector<64x512xf32>,
    return
  }
  func.func @transform_0(%arg0: i32) -> (i32, i32) {
    %c0_i32 = arith.constant 0 : i32
    %c0_i32_0 = arith.constant 0 : i32
    return %arg0, %c0_i32 : i32, i32
  }
  func.func @transform_1(%arg0: i32) -> (i32, i32) {
    %c0_i32 = arith.constant 0 : i32
    %c0_i32_0 = arith.constant 0 : i32
    return %arg0, %c0_i32 : i32, i32
  }
  func.func @transform_2(%arg0: i32) -> (i32, i32) {
    %c0_i32 = arith.constant 0 : i32
    %c0_i32_0 = arith.constant 0 : i32
    %c0_i32_1 = arith.constant 0 : i32
    return %c0_i32, %c0_i32_0 : i32, i32
  }
  func.func @transform_3(%arg0: i32) -> (i32, i32) {
    %c0_i32 = arith.constant 0 : i32
    %c0_i32_0 = arith.constant 0 : i32
    %c0_i32_1 = arith.constant 0 : i32
    return %c0_i32, %c0_i32_0 : i32, i32
  }
  func.func @transform_4(%arg0: i32) -> (i32, i32) {
    %c0_i32 = arith.constant 0 : i32
    %c0_i32_0 = arith.constant 0 : i32
    %c0_i32_1 = arith.constant 0 : i32
    return %c0_i32, %c0_i32_0 : i32, i32
  }
  func.func @transform_5(%arg0: i32) -> (i32, i32) {
    %c0_i32 = arith.constant 0 : i32
    %c0_i32_0 = arith.constant 0 : i32
    %c0_i32_1 = arith.constant 0 : i32
    return %c0_i32, %c0_i32_0 : i32, i32
  }
  func.func @transform_6(%arg0: i32) -> (i32, i32) {
    %c0_i32 = arith.constant 0 : i32
    %c0_i32_0 = arith.constant 0 : i32
    %c0_i32_1 = arith.constant 0 : i32
    return %c0_i32, %c0_i32_0 : i32, i32
  }
  func.func @transform_7(%arg0: i32) -> (i32, i32) {
    %c0_i32 = arith.constant 0 : i32
    %c0_i32_0 = arith.constant 0 : i32
    return %arg0, %c0_i32 : i32, i32
  }
}

</mosaic_0001>

<llo_original>
// kernel: tpu_custom_call.1
$region0: #{tpu_custom_call.1}
  #allocation0 [shape = 'u32[]', space=smem, size = 0x4, offset = 0x4, fixed_abs, tag = 'smem constant byte address 0x4 - core index']
  #allocation1 [shape = 'u32[144,128]{1,0:T(1,128)}', space=vmem, size = 0x12000, scoped, tag = 'internal scratch']
  %s0 = inlined_call_operand.hbm [shape: f32[64,128], index: 0, kind: input, shape index: {}]
  %s1 = inlined_call_operand.hbm [shape: f32[64,128], index: 1, kind: input, shape index: {}]
  %s2 = inlined_call_operand.hbm [shape: f32[128,128], index: 2, kind: input, shape index: {}]
  %s3 = inlined_call_operand.hbm [shape: f32[128,128], index: 3, kind: input, shape index: {}]
  %s4 = inlined_call_operand.vmem [shape: f32[1,128], index: 4, kind: input, shape index: {}]
  %s5 = inlined_call_operand.hbm [shape: f32[128,512], index: 5, kind: input, shape index: {}]
  %s6 = inlined_call_operand.vmem [shape: f32[1,512], index: 6, kind: input, shape index: {}]
  %s7 = inlined_call_operand.hbm [shape: f32[64,512], index: 7, kind: output, shape index: {}]
  %s8 = sld [smem:[#allocation0]]
  $region58: #{tpu_custom_call.1} parent=0
    _
  %s10 = ssub.s32 1, %s8
  %s11 = scalar_select 0, %s10, %s8
  $region1: #{tpu_custom_call.1} parent=0
    #allocation2 [shape = 'u8[32768]{0}', space=vmem, size = 0x8000, scoped, tag = 'input window, operand 0, single buffered']
    #allocation3 [shape = 's32[1]{0}', space=sflag, size = 0x4, scoped, tag = 'scoped memory for tpu_custom_call.1']
    #allocation4 [shape = 's32[1]{0}', space=sflag, size = 0x4, scoped, tag = 'scoped memory for tpu_custom_call.1']
    #allocation5 [shape = 'u8[32768]{0}', space=vmem, size = 0x8000, scoped, tag = 'input window, operand 1, single buffered']
    #allocation6 [shape = 's32[1]{0}', space=sflag, size = 0x4, scoped, tag = 'scoped memory for tpu_custom_call.1']
    #allocation7 [shape = 'u8[65536]{0}', space=vmem, size = 0x10000, scoped, tag = 'input window, operand 2, single buffered']
    #allocation8 [shape = 'u8[65536]{0}', space=vmem, size = 0x10000, scoped, tag = 'input window, operand 3, single buffered']
    #allocation9 [shape = 's32[1]{0}', space=sflag, size = 0x4, scoped, tag = 'scoped memory for tpu_custom_call.1']
    #allocation10 [shape = 'u8[262144]{0}', space=vmem, size = 0x40000, scoped, tag = 'input window, operand 5, single buffered']
    #allocation11 [shape = 'u8[131072]{0}', space=vmem, size = 0x20000, scoped, tag = 'output window, operand 0, single buffered']
    %12 = vsyncpa [#allocation3], 0
    %13 = vsyncpa [#allocation6], 0
    %14 = vsyncpa [#allocation9], 0
    %15 = vsyncpa [#allocation4], 0
    // Predicated region
    $region2: #{tpu_custom_call.1} parent=1 // pred_check
      _
    $region3: #{tpu_custom_call.1} parent=1 // pred_check_branch
      %17 = sbr.rel (0) target = $region5
    $region4: #{tpu_custom_call.1} parent=1 // pred_region
      %s19 = ssub.s32 1024, 1024
      %20 = vsyncadd [#allocation3], %s19
      %s21 = sshll.u32 [#allocation2], 4
      %s22 = int_to_ptr.vmem [resolvable:$true] %s21
      %27 = dma.hbm_to_vmem [thread:$0]  %s0, 1024, %s22, [#allocation3], 128, 128, 8
    $region5: #{tpu_custom_call.1} parent=1 // pred_fallthru
      _
    // Predicated region
    $region6: #{tpu_custom_call.1} parent=1 // pred_check
      _
    $region7: #{tpu_custom_call.1} parent=1 // pred_check_branch
      %29 = sbr.rel (0) target = $region9
    $region8: #{tpu_custom_call.1} parent=1 // pred_region
      %s31 = ssub.s32 1024, 1024
      %32 = vsyncadd [#allocation6], %s31
      %s33 = sshll.u32 [#allocation5], 4
      %s34 = int_to_ptr.vmem [resolvable:$true] %s33
      %39 = dma.hbm_to_vmem [thread:$0]  %s1, 1024, %s34, [#allocation6], 128, 128, 8
    $region9: #{tpu_custom_call.1} parent=1 // pred_fallthru
      _
    // Predicated region
    $region10: #{tpu_custom_call.1} parent=1 // pred_check
      _
    $region11: #{tpu_custom_call.1} parent=1 // pred_check_branch
      %41 = sbr.rel (0) target = $region13
    $region12: #{tpu_custom_call.1} parent=1 // pred_region
      %s43 = ssub.s32 2048, 2048
      %44 = vsyncadd [#allocation6], %s43
      %s45 = sshll.u32 [#allocation7], 4
      %s46 = int_to_ptr.vmem [resolvable:$true] %s45
      %51 = dma.hbm_to_vmem [thread:$0]  %s2, 2048, %s46, [#allocation6], 128, 128, 8
    $region13: #{tpu_custom_call.1} parent=1 // pred_fallthru
      _
    // Predicated region
    $region14: #{tpu_custom_call.1} parent=1 // pred_check
      _
    $region15: #{tpu_custom_call.1} parent=1 // pred_check_branch
      %53 = sbr.rel (0) target = $region17
    $region16: #{tpu_custom_call.1} parent=1 // pred_region
      %s55 = ssub.s32 2048, 2048
      %56 = vsyncadd [#allocation9], %s55
      %s57 = sshll.u32 [#allocation8], 4
      %s58 = int_to_ptr.vmem [resolvable:$true] %s57
      %63 = dma.hbm_to_vmem [thread:$0]  %s3, 2048, %s58, [#allocation9], 128, 128, 8
    $region17: #{tpu_custom_call.1} parent=1 // pred_fallthru
      _
    // Predicated region
    $region18: #{tpu_custom_call.1} parent=1 // pred_check
      _
    $region19: #{tpu_custom_call.1} parent=1 // pred_check_branch
      %65 = sbr.rel (0) target = $region21
    $region20: #{tpu_custom_call.1} parent=1 // pred_region
      _
    $region21: #{tpu_custom_call.1} parent=1 // pred_fallthru
      _
    // Predicated region
    $region22: #{tpu_custom_call.1} parent=1 // pred_check
      _
    $region23: #{tpu_custom_call.1} parent=1 // pred_check_branch
      %67 = sbr.rel (0) target = $region25
    $region24: #{tpu_custom_call.1} parent=1 // pred_region
      %s69 = ssub.s32 8192, 8192
      %70 = vsyncadd [#allocation9], %s69
      %s71 = sshll.u32 [#allocation10], 4
      %s72 = int_to_ptr.vmem [resolvable:$true] %s71
      %77 = dma.hbm_to_vmem [thread:$0]  %s5, 8192, %s72, [#allocation9], 512, 512, 32
    $region25: #{tpu_custom_call.1} parent=1 // pred_fallthru
      _
    // Predicated region
    $region26: #{tpu_custom_call.1} parent=1 // pred_check
      _
    $region27: #{tpu_custom_call.1} parent=1 // pred_check_branch
      %79 = sbr.rel (0) target = $region29
    $region28: #{tpu_custom_call.1} parent=1 // pred_region
      _
    $region29: #{tpu_custom_call.1} parent=1 // pred_fallthru
      _
    // Predicated region
    $region30: #{tpu_custom_call.1} parent=1 // pred_check
      _
    $region31: #{tpu_custom_call.1} parent=1 // pred_check_branch
      %81 = sbr.rel (0) target = $region33
    $region32: #{tpu_custom_call.1} parent=1 // pred_region
      %82 = dma.done [#allocation3], 1024
    $region33: #{tpu_custom_call.1} parent=1 // pred_fallthru
      _
    // Predicated region
    $region34: #{tpu_custom_call.1} parent=1 // pred_check
      _
    $region35: #{tpu_custom_call.1} parent=1 // pred_check_branch
      %84 = sbr.rel (0) target = $region37
    $region36: #{tpu_custom_call.1} parent=1 // pred_region
      %85 = dma.done [#allocation6], 1024
    $region37: #{tpu_custom_call.1} parent=1 // pred_fallthru
      _
    // Predicated region
    $region38: #{tpu_custom_call.1} parent=1 // pred_check
      _
    $region39: #{tpu_custom_call.1} parent=1 // pred_check_branch
      %87 = sbr.rel (0) target = $region41
    $region40: #{tpu_custom_call.1} parent=1 // pred_region
      %88 = dma.done [#allocation6], 2048
    $region41: #{tpu_custom_call.1} parent=1 // pred_fallthru
      _
    // Predicated region
    $region42: #{tpu_custom_call.1} parent=1 // pred_check
      _
    $region43: #{tpu_custom_call.1} parent=1 // pred_check_branch
      %90 = sbr.rel (0) target = $region45
    $region44: #{tpu_custom_call.1} parent=1 // pred_region
      %91 = dma.done [#allocation9], 2048
    $region45: #{tpu_custom_call.1} parent=1 // pred_fallthru
      _
    // Predicated region
    $region46: #{tpu_custom_call.1} parent=1 // pred_check
      _
    $region47: #{tpu_custom_call.1} parent=1 // pred_check_branch
      %93 = sbr.rel (0) target = $region49
    $region48: #{tpu_custom_call.1} parent=1 // pred_region
      %94 = dma.done [#allocation9], 8192
    $region49: #{tpu_custom_call.1} parent=1 // pred_fallthru
      _
    %v95 = vld [vmem:[#allocation2] sm:$0xff]
    %v96 = vld [vmem:[#allocation2 + $0x8] sm:$0xff]
    %v97 = vld [vmem:[#allocation2 + $0x10] sm:$0xff]
    %v98 = vld [vmem:[#allocation2 + $0x18] sm:$0xff]
    %v99 = vld [vmem:[#allocation2 + $0x20] sm:$0xff]
    %v100 = vld [vmem:[#allocation2 + $0x28] sm:$0xff]
    %v101 = vld [vmem:[#allocation2 + $0x30] sm:$0xff]
    %v102 = vld [vmem:[#allocation2 + $0x38] sm:$0xff]
    %v103 = vld [vmem:[#allocation7] sm:$0xff]
    %v104 = vld [vmem:[#allocation7 + $0x8] sm:$0xff]
    %v105 = vld [vmem:[#allocation7 + $0x10] sm:$0xff]
    %v106 = vld [vmem:[#allocation7 + $0x18] sm:$0xff]
    %v107 = vld [vmem:[#allocation7 + $0x20] sm:$0xff]
    %v108 = vld [vmem:[#allocation7 + $0x28] sm:$0xff]
    %v109 = vld [vmem:[#allocation7 + $0x30] sm:$0xff]
    %v110 = vld [vmem:[#allocation7 + $0x38] sm:$0xff]
    %v111 = vld [vmem:[#allocation7 + $0x40] sm:$0xff]
    %v112 = vld [vmem:[#allocation7 + $0x48] sm:$0xff]
    %v113 = vld [vmem:[#allocation7 + $0x50] sm:$0xff]
    %v114 = vld [vmem:[#allocation7 + $0x58] sm:$0xff]
    %v115 = vld [vmem:[#allocation7 + $0x60] sm:$0xff]
    %v116 = vld [vmem:[#allocation7 + $0x68] sm:$0xff]
    %v117 = vld [vmem:[#allocation7 + $0x70] sm:$0xff]
    %v118 = vld [vmem:[#allocation7 + $0x78] sm:$0xff]
    %v119 = vld [vmem:[#allocation5] sm:$0xff]
    %v120 = vld [vmem:[#allocation5 + $0x8] sm:$0xff]
    %v121 = vld [vmem:[#allocation5 + $0x10] sm:$0xff]
    %v122 = vld [vmem:[#allocation5 + $0x18] sm:$0xff]
    %v123 = vld [vmem:[#allocation5 + $0x20] sm:$0xff]
    %v124 = vld [vmem:[#allocation5 + $0x28] sm:$0xff]
    %v125 = vld [vmem:[#allocation5 + $0x30] sm:$0xff]
    %v126 = vld [vmem:[#allocation5 + $0x38] sm:$0xff]
    %v127 = vld [vmem:[#allocation8] sm:$0xff]
    %v128 = vld [vmem:[#allocation8 + $0x8] sm:$0xff]
    %v129 = vld [vmem:[#allocation8 + $0x10] sm:$0xff]
    %v130 = vld [vmem:[#allocation8 + $0x18] sm:$0xff]
    %v131 = vld [vmem:[#allocation8 + $0x20] sm:$0xff]
    %v132 = vld [vmem:[#allocation8 + $0x28] sm:$0xff]
    %v133 = vld [vmem:[#allocation8 + $0x30] sm:$0xff]
    %v134 = vld [vmem:[#allocation8 + $0x38] sm:$0xff]
    %v135 = vld [vmem:[#allocation8 + $0x40] sm:$0xff]
    %v136 = vld [vmem:[#allocation8 + $0x48] sm:$0xff]
    %v137 = vld [vmem:[#allocation8 + $0x50] sm:$0xff]
    %v138 = vld [vmem:[#allocation8 + $0x58] sm:$0xff]
    %v139 = vld [vmem:[#allocation8 + $0x60] sm:$0xff]
    %v140 = vld [vmem:[#allocation8 + $0x68] sm:$0xff]
    %v141 = vld [vmem:[#allocation8 + $0x70] sm:$0xff]
    %v142 = vld [vmem:[#allocation8 + $0x78] sm:$0xff]
    %143 = vmatprep.subr.mxu0 0.0
    %144 = vmatpush1.msra.mxu0 %v127
    %145 = vmatprep.subr.mxu0 0.0
    %146 = vmatpush1.msra.mxu0 %v128
    %147 = vmatprep.subr.mxu0 0.0
    %148 = vmatpush1.msra.mxu0 %v129
    %149 = vmatprep.subr.mxu0 0.0
    %150 = vmatpush1.msra.mxu0 %v130
    %151 = vmatprep.subr.mxu0 0.0
    %152 = vmatpush1.msra.mxu0 %v131
    %153 = vmatprep.subr.mxu0 0.0
    %154 = vmatpush1.msra.mxu0 %v132
    %155 = vmatprep.subr.mxu0 0.0
    %156 = vmatpush1.msra.mxu0 %v133
    %157 = vmatprep.subr.mxu0 0.0
    %158 = vmatpush1.msra.mxu0 %v134
    %159 = vmatprep.subr.mxu0 0.0
    %160 = vmatpush1.msra.mxu0 %v135
    %161 = vmatprep.subr.mxu0 0.0
    %162 = vmatpush1.msra.mxu0 %v136
    %163 = vmatprep.subr.mxu0 0.0
    %164 = vmatpush1.msra.mxu0 %v137
    %165 = vmatprep.subr.mxu0 0.0
    %166 = vmatpush1.msra.mxu0 %v138
    %167 = vmatprep.subr.mxu0 0.0
    %168 = vmatpush1.msra.mxu0 %v139
    %169 = vmatprep.subr.mxu0 0.0
    %170 = vmatpush1.msra.mxu0 %v140
    %171 = vmatprep.subr.mxu0 0.0
    %172 = vmatpush1.msra.mxu0 %v141
    %173 = vmatprep.subr.mxu0 0.0
    %174 = vmatpush1.msra.mxu0 %v142
    %175 = vmatprep.subr.mxu0 0.0
    %176 = vmatpush1.msra.mxu0 0.0
    %177 = vmatprep.subr.mxu0 0.0
    %178 = vmatpush1.msra.mxu0 0.0
    %179 = vmatprep.subr.mxu0 0.0
    %180 = vmatpush1.msra.mxu0 0.0
    %181 = vmatprep.subr.mxu0 0.0
    %182 = vmatpush1.msra.mxu0 0.0
    %183 = vmatprep.subr.mxu0 0.0
    %184 = vmatpush1.msra.mxu0 0.0
    %185 = vmatprep.subr.mxu0 0.0
    %186 = vmatpush1.msra.mxu0 0.0
    %187 = vmatprep.subr.mxu0 0.0
    %188 = vmatpush1.msra.mxu0 0.0
    %189 = vmatprep.subr.mxu0 0.0
    %190 = vmatpush1.msra.mxu0 0.0
    %191 = vmatprep.subr.mxu0 0.0
    %192 = vmatpush1.msra.mxu0 0.0
    %193 = vmatprep.subr.mxu0 0.0
    %194 = vmatpush1.msra.mxu0 0.0
    %195 = vmatprep.subr.mxu0 0.0
    %196 = vmatpush1.msra.mxu0 0.0
    %197 = vmatprep.subr.mxu0 0.0
    %198 = vmatpush1.msra.mxu0 0.0
    %199 = vmatprep.subr.mxu0 0.0
    %200 = vmatpush1.msra.mxu0 0.0
    %201 = vmatprep.subr.mxu0 0.0
    %202 = vmatpush1.msra.mxu0 0.0
    %203 = vmatprep.subr.mxu0 0.0
    %204 = vmatpush1.msra.mxu0 0.0
    %205 = vmatprep.subr.mxu0 0.0
    %206 = vmatpush1.msra.mxu0 0.0
    %207 = vmatprep.mubr.f32.mxu0 0.0
    %208 = vmatmul.mubr.f32.gmra.mrb[0].mxu0 %v119
    %v209 = vpop.f32.mrb[0].mxu0
    %v210 = vadd.f32 0.0, %v209
    %v211 = vpop.f32.mrb[0].mxu0
    %212 = vmatprep.mubr.f32.mxu0 0.0
    %213 = vmatmul.mubr.f32.gmra.mrb[0].mxu0 %v120
    %v214 = vpop.f32.mrb[0].mxu0
    %v215 = vadd.f32 0.0, %v214
    %v216 = vpop.f32.mrb[0].mxu0
    %217 = vmatprep.mubr.f32.mxu0 0.0
    %218 = vmatmul.mubr.f32.gmra.mrb[0].mxu0 %v121
    %v219 = vpop.f32.mrb[0].mxu0
    %v220 = vadd.f32 0.0, %v219
    %v221 = vpop.f32.mrb[0].mxu0
    %222 = vmatprep.mubr.f32.mxu0 0.0
    %223 = vmatmul.mubr.f32.gmra.mrb[0].mxu0 %v122
    %v224 = vpop.f32.mrb[0].mxu0
    %v225 = vadd.f32 0.0, %v224
    %v226 = vpop.f32.mrb[0].mxu0
    %227 = vmatprep.mubr.f32.mxu0 0.0
    %228 = vmatmul.mubr.f32.gmra.mrb[0].mxu0 %v123
    %v229 = vpop.f32.mrb[0].mxu0
    %v230 = vadd.f32 0.0, %v229
    %v231 = vpop.f32.mrb[0].mxu0
    %232 = vmatprep.mubr.f32.mxu0 0.0
    %233 = vmatmul.mubr.f32.gmra.mrb[0].mxu0 %v124
    %v234 = vpop.f32.mrb[0].mxu0
    %v235 = vadd.f32 0.0, %v234
    %v236 = vpop.f32.mrb[0].mxu0
    %237 = vmatprep.mubr.f32.mxu0 0.0
    %238 = vmatmul.mubr.f32.gmra.mrb[0].mxu0 %v125
    %v239 = vpop.f32.mrb[0].mxu0
    %v240 = vadd.f32 0.0, %v239
    %v241 = vpop.f32.mrb[0].mxu0
    %242 = vmatprep.mubr.f32.mxu0 0.0
    %243 = vmatmul.mubr.f32.gmra.mrb[0].mxu0 %v126
    %v244 = vpop.f32.mrb[0].mxu0
    %v245 = vadd.f32 0.0, %v244
    %v246 = vpop.f32.mrb[0].mxu0
    %247 = vdwg.mxu0
    %248 = vmatprep.subr.mxu0 0.0
    %249 = vmatpush1.msra.mxu0 %v103
    %250 = vmatprep.subr.mxu0 0.0
    %251 = vmatpush1.msra.mxu0 %v104
    %252 = vmatprep.subr.mxu0 0.0
    %253 = vmatpush1.msra.mxu0 %v105
    %254 = vmatprep.subr.mxu0 0.0
    %255 = vmatpush1.msra.mxu0 %v106
    %256 = vmatprep.subr.mxu0 0.0
    %257 = vmatpush1.msra.mxu0 %v107
    %258 = vmatprep.subr.mxu0 0.0
    %259 = vmatpush1.msra.mxu0 %v108
    %260 = vmatprep.subr.mxu0 0.0
    %261 = vmatpush1.msra.mxu0 %v109
    %262 = vmatprep.subr.mxu0 0.0
    %263 = vmatpush1.msra.mxu0 %v110
    %264 = vmatprep.subr.mxu0 0.0
    %265 = vmatpush1.msra.mxu0 %v111
    %266 = vmatprep.subr.mxu0 0.0
    %267 = vmatpush1.msra.mxu0 %v112
    %268 = vmatprep.subr.mxu0 0.0
    %269 = vmatpush1.msra.mxu0 %v113
    %270 = vmatprep.subr.mxu0 0.0
    %271 = vmatpush1.msra.mxu0 %v114
    %272 = vmatprep.subr.mxu0 0.0
    %273 = vmatpush1.msra.mxu0 %v115
    %274 = vmatprep.subr.mxu0 0.0
    %275 = vmatpush1.msra.mxu0 %v116
    %276 = vmatprep.subr.mxu0 0.0
    %277 = vmatpush1.msra.mxu0 %v117
    %278 = vmatprep.subr.mxu0 0.0
    %279 = vmatpush1.msra.mxu0 %v118
    %280 = vmatprep.subr.mxu0 0.0
    %281 = vmatpush1.msra.mxu0 0.0
    %282 = vmatprep.subr.mxu0 0.0
    %283 = vmatpush1.msra.mxu0 0.0
    %284 = vmatprep.subr.mxu0 0.0
    %285 = vmatpush1.msra.mxu0 0.0
    %286 = vmatprep.subr.mxu0 0.0
    %287 = vmatpush1.msra.mxu0 0.0
    %288 = vmatprep.subr.mxu0 0.0
    %289 = vmatpush1.msra.mxu0 0.0
    %290 = vmatprep.subr.mxu0 0.0
    %291 = vmatpush1.msra.mxu0 0.0
    %292 = vmatprep.subr.mxu0 0.0
    %293 = vmatpush1.msra.mxu0 0.0
    %294 = vmatprep.subr.mxu0 0.0
    %295 = vmatpush1.msra.mxu0 0.0
    %296 = vmatprep.subr.mxu0 0.0
    %297 = vmatpush1.msra.mxu0 0.0
    %298 = vmatprep.subr.mxu0 0.0
    %299 = vmatpush1.msra.mxu0 0.0
    %300 = vmatprep.subr.mxu0 0.0
    %301 = vmatpush1.msra.mxu0 0.0
    %302 = vmatprep.subr.mxu0 0.0
    %303 = vmatpush1.msra.mxu0 0.0
    %304 = vmatprep.subr.mxu0 0.0
    %305 = vmatpush1.msra.mxu0 0.0
    %306 = vmatprep.subr.mxu0 0.0
    %307 = vmatpush1.msra.mxu0 0.0
    %308 = vmatprep.subr.mxu0 0.0
    %309 = vmatpush1.msra.mxu0 0.0
    %310 = vmatprep.subr.mxu0 0.0
    %311 = vmatpush1.msra.mxu0 0.0
    %312 = vmatprep.mubr.f32.mxu0 0.0
    %313 = vmatmul.mubr.f32.gmra.mrb[0].mxu0 %v95
    %v314 = vpop.f32.mrb[0].mxu0
    %v315 = vadd.f32 %v210, %v314
    %v316 = vpop.f32.mrb[0].mxu0
    %317 = vmatprep.mubr.f32.mxu0 0.0
    %318 = vmatmul.mubr.f32.gmra.mrb[0].mxu0 %v96
    %v319 = vpop.f32.mrb[0].mxu0
    %v320 = vadd.f32 %v215, %v319
    %v321 = vpop.f32.mrb[0].mxu0
    %322 = vmatprep.mubr.f32.mxu0 0.0
    %323 = vmatmul.mubr.f32.gmra.mrb[0].mxu0 %v97
    %v324 = vpop.f32.mrb[0].mxu0
    %v325 = vadd.f32 %v220, %v324
    %v326 = vpop.f32.mrb[0].mxu0
    %327 = vmatprep.mubr.f32.mxu0 0.0
    %328 = vmatmul.mubr.f32.gmra.mrb[0].mxu0 %v98
    %v329 = vpop.f32.mrb[0].mxu0
    %v330 = vadd.f32 %v225, %v329
    %v331 = vpop.f32.mrb[0].mxu0
    %332 = vmatprep.mubr.f32.mxu0 0.0
    %333 = vmatmul.mubr.f32.gmra.mrb[0].mxu0 %v99
    %v334 = vpop.f32.mrb[0].mxu0
    %v335 = vadd.f32 %v230, %v334
    %v336 = vpop.f32.mrb[0].mxu0
    %337 = vmatprep.mubr.f32.mxu0 0.0
    %338 = vmatmul.mubr.f32.gmra.mrb[0].mxu0 %v100
    %v339 = vpop.f32.mrb[0].mxu0
    %v340 = vadd.f32 %v235, %v339
    %v341 = vpop.f32.mrb[0].mxu0
    %342 = vmatprep.mubr.f32.mxu0 0.0
    %343 = vmatmul.mubr.f32.gmra.mrb[0].mxu0 %v101
    %v344 = vpop.f32.mrb[0].mxu0
    %v345 = vadd.f32 %v240, %v344
    %v346 = vpop.f32.mrb[0].mxu0
    %347 = vmatprep.mubr.f32.mxu0 0.0
    %348 = vmatmul.mubr.f32.gmra.mrb[0].mxu0 %v102
    %v349 = vpop.f32.mrb[0].mxu0
    %v350 = vadd.f32 %v245, %v349
    %v351 = vpop.f32.mrb[0].mxu0
    %352 = vdwg.mxu0
    %v353 = vld [vmem:[%s4] sm:$0x1]
    %v355 = vlaneseq
    %v356 = vshrl.u32 %v355, 7
    %v357 = vsub.s32 0, %v356
    %v358 = vrot.slane %v353, %v357
    %v360 = vadd.f32 %v315, %v358
    %v361 = vadd.f32 %v320, %v358
    %v362 = vadd.f32 %v325, %v358
    %v363 = vadd.f32 %v330, %v358
    %v364 = vadd.f32 %v335, %v358
    %v365 = vadd.f32 %v340, %v358
    %v366 = vadd.f32 %v345, %v358
    %v367 = vadd.f32 %v350, %v358
    %v368 = vld [vmem:[#allocation10] sm:$0xff]
    %v369 = vld [vmem:[#allocation10 + $0x8] sm:$0xff]
    %v370 = vld [vmem:[#allocation10 + $0x10] sm:$0xff]
    %v371 = vld [vmem:[#allocation10 + $0x18] sm:$0xff]
    %v372 = vld [vmem:[#allocation10 + $0x20] sm:$0xff]
    %v373 = vld [vmem:[#allocation10 + $0x28] sm:$0xff]
    %v374 = vld [vmem:[#allocation10 + $0x30] sm:$0xff]
    %v375 = vld [vmem:[#allocation10 + $0x38] sm:$0xff]
    %v376 = vld [vmem:[#allocation10 + $0x40] sm:$0xff]
    %v377 = vld [vmem:[#allocation10 + $0x48] sm:$0xff]
    %v378 = vld [vmem:[#allocation10 + $0x50] sm:$0xff]
    %v379 = vld [vmem:[#allocation10 + $0x58] sm:$0xff]
    %v380 = vld [vmem:[#allocation10 + $0x60] sm:$0xff]
    %v381 = vld [vmem:[#allocation10 + $0x68] sm:$0xff]
    %v382 = vld [vmem:[#allocation10 + $0x70] sm:$0xff]
    %v383 = vld [vmem:[#allocation10 + $0x78] sm:$0xff]
    %v384 = vld [vmem:[#allocation10 + $0x80] sm:$0xff]
    %v385 = vld [vmem:[#allocation10 + $0x88] sm:$0xff]
    %v386 = vld [vmem:[#allocation10 + $0x90] sm:$0xff]
    %v387 = vld [vmem:[#allocation10 + $0x98] sm:$0xff]
    %v388 = vld [vmem:[#allocation10 + $0xa0] sm:$0xff]
    %v389 = vld [vmem:[#allocation10 + $0xa8] sm:$0xff]
    %v390 = vld [vmem:[#allocation10 + $0xb0] sm:$0xff]
    %v391 = vld [vmem:[#allocation10 + $0xb8] sm:$0xff]
    %v392 = vld [vmem:[#allocation10 + $0xc0] sm:$0xff]
    %v393 = vld [vmem:[#allocation10 + $0xc8] sm:$0xff]
    %v394 = vld [vmem:[#allocation10 + $0xd0] sm:$0xff]
    %v395 = vld [vmem:[#allocation10 + $0xd8] sm:$0xff]
    %v396 = vld [vmem:[#allocation10 + $0xe0] sm:$0xff]
    %v397 = vld [vmem:[#allocation10 + $0xe8] sm:$0xff]
    %v398 = vld [vmem:[#allocation10 + $0xf0] sm:$0xff]
    %v399 = vld [vmem:[#allocation10 + $0xf8] sm:$0xff]
    %v400 = vld [vmem:[#allocation10 + $0x100] sm:$0xff]
    %v401 = vld [vmem:[#allocation10 + $0x108] sm:$0xff]
    %v402 = vld [vmem:[#allocation10 + $0x110] sm:$0xff]
    %v403 = vld [vmem:[#allocation10 + $0x118] sm:$0xff]
    %v404 = vld [vmem:[#allocation10 + $0x120] sm:$0xff]
    %v405 = vld [vmem:[#allocation10 + $0x128] sm:$0xff]
    %v406 = vld [vmem:[#allocation10 + $0x130] sm:$0xff]
    %v407 = vld [vmem:[#allocation10 + $0x138] sm:$0xff]
    %v408 = vld [vmem:[#allocation10 + $0x140] sm:$0xff]
    %v409 = vld [vmem:[#allocation10 + $0x148] sm:$0xff]
    %v410 = vld [vmem:[#allocation10 + $0x150] sm:$0xff]
    %v411 = vld [vmem:[#allocation10 + $0x158] sm:$0xff]
    %v412 = vld [vmem:[#allocation10 + $0x160] sm:$0xff]
    %v413 = vld [vmem:[#allocation10 + $0x168] sm:$0xff]
    %v414 = vld [vmem:[#allocation10 + $0x170] sm:$0xff]
    %v415 = vld [vmem:[#allocation10 + $0x178] sm:$0xff]
    %v416 = vld [vmem:[#allocation10 + $0x180] sm:$0xff]
    %v417 = vld [vmem:[#allocation10 + $0x188] sm:$0xff]
    %v418 = vld [vmem:[#allocation10 + $0x190] sm:$0xff]
    %v419 = vld [vmem:[#allocation10 + $0x198] sm:$0xff]
    %v420 = vld [vmem:[#allocation10 + $0x1a0] sm:$0xff]
    %v421 = vld [vmem:[#allocation10 + $0x1a8] sm:$0xff]
    %v422 = vld [vmem:[#allocation10 + $0x1b0] sm:$0xff]
    %v423 = vld [vmem:[#allocation10 + $0x1b8] sm:$0xff]
    %v424 = vld [vmem:[#allocation10 + $0x1c0] sm:$0xff]
    %v425 = vld [vmem:[#allocation10 + $0x1c8] sm:$0xff]
    %v426 = vld [vmem:[#allocation10 + $0x1d0] sm:$0xff]
    %v427 = vld [vmem:[#allocation10 + $0x1d8] sm:$0xff]
    %v428 = vld [vmem:[#allocation10 + $0x1e0] sm:$0xff]
    %v429 = vld [vmem:[#allocation10 + $0x1e8] sm:$0xff]
    %v430 = vld [vmem:[#allocation10 + $0x1f0] sm:$0xff]
    %v431 = vld [vmem:[#allocation10 + $0x1f8] sm:$0xff]
    %v432 = vld [vmem:[%s6] sm:$0xf]
    %v434 = vlaneseq
    %v435 = vshrl.u32 %v434, 7
    %v436 = vsub.s32 0, %v435
    %v437 = vrot.slane %v432, %v436
    %v438 = vlaneseq
    %v439 = vshrl.u32 %v438, 7
    %v440 = vsub.s32 1, %v439
    %v441 = vrot.slane %v432, %v440
    %v442 = vlaneseq
    %v443 = vshrl.u32 %v442, 7
    %v444 = vsub.s32 2, %v443
    %v445 = vrot.slane %v432, %v444
    %v446 = vlaneseq
    %v447 = vshrl.u32 %v446, 7
    %v448 = vsub.s32 3, %v447
    %v449 = vrot.slane %v432, %v448
    %454 = vmatprep.subr.mxu0 %v369
    %455 = vmatpush1.msra.mxu0 %v368
    %456 = vmatprep.subr.mxu0 %v373
    %457 = vmatpush1.msra.mxu0 %v372
    %458 = vmatprep.subr.mxu0 %v377
    %459 = vmatpush1.msra.mxu0 %v376
    %460 = vmatprep.subr.mxu0 %v381
    %461 = vmatpush1.msra.mxu0 %v380
    %462 = vmatprep.subr.mxu0 %v385
    %463 = vmatpush1.msra.mxu0 %v384
    %464 = vmatprep.subr.mxu0 %v389
    %465 = vmatpush1.msra.mxu0 %v388
    %466 = vmatprep.subr.mxu0 %v393
    %467 = vmatpush1.msra.mxu0 %v392
    %468 = vmatprep.subr.mxu0 %v397
    %469 = vmatpush1.msra.mxu0 %v396
    %470 = vmatprep.subr.mxu0 %v401
    %471 = vmatpush1.msra.mxu0 %v400
    %472 = vmatprep.subr.mxu0 %v405
    %473 = vmatpush1.msra.mxu0 %v404
    %474 = vmatprep.subr.mxu0 %v409
    %475 = vmatpush1.msra.mxu0 %v408
    %476 = vmatprep.subr.mxu0 %v413
    %477 = vmatpush1.msra.mxu0 %v412
    %478 = vmatprep.subr.mxu0 %v417
    %479 = vmatpush1.msra.mxu0 %v416
    %480 = vmatprep.subr.mxu0 %v421
    %481 = vmatpush1.msra.mxu0 %v420
    %482 = vmatprep.subr.mxu0 %v425
    %483 = vmatpush1.msra.mxu0 %v424
    %484 = vmatprep.subr.mxu0 %v429
    %485 = vmatpush1.msra.mxu0 %v428
    %486 = vmatprep.subr.mxu0 0.0
    %487 = vmatpush1.msra.mxu0 0.0
    %488 = vmatprep.subr.mxu0 0.0
    %489 = vmatpush1.msra.mxu0 0.0
    %490 = vmatprep.subr.mxu0 0.0
    %491 = vmatpush1.msra.mxu0 0.0
    %492 = vmatprep.subr.mxu0 0.0
    %493 = vmatpush1.msra.mxu0 0.0
    %494 = vmatprep.subr.mxu0 0.0
    %495 = vmatpush1.msra.mxu0 0.0
    %496 = vmatprep.subr.mxu0 0.0
    %497 = vmatpush1.msra.mxu0 0.0
    %498 = vmatprep.subr.mxu0 0.0
    %499 = vmatpush1.msra.mxu0 0.0
    %500 = vmatprep.subr.mxu0 0.0
    %501 = vmatpush1.msra.mxu0 0.0
    %502 = vmatprep.subr.mxu0 0.0
    %503 = vmatpush1.msra.mxu0 0.0
    %504 = vmatprep.subr.mxu0 0.0
    %505 = vmatpush1.msra.mxu0 0.0
    %506 = vmatprep.subr.mxu0 0.0
    %507 = vmatpush1.msra.mxu0 0.0
    %508 = vmatprep.subr.mxu0 0.0
    %509 = vmatpush1.msra.mxu0 0.0
    %510 = vmatprep.subr.mxu0 0.0
    %511 = vmatpush1.msra.mxu0 0.0
    %512 = vmatprep.subr.mxu0 0.0
    %513 = vmatpush1.msra.mxu0 0.0
    %514 = vmatprep.subr.mxu0 0.0
    %515 = vmatpush1.msra.mxu0 0.0
    %516 = vmatprep.subr.mxu0 0.0
    %517 = vmatpush1.msra.mxu0 0.0
    %518 = vmatprep.mubr.f32.mxu0 0.0
    %519 = vmatmul.mubr.f32.gmra.mrb[0].mxu0 %v360
    %v520 = vpop.f32.mrb[0].mxu0
    %v521 = vadd.f32 %v437, %v520
    %v522 = vpop.f32.mrb[0].mxu0
    %v523 = vadd.f32 %v441, %v522
    %524 = vmatprep.mubr.f32.mxu0 0.0
    %525 = vmatmul.mubr.f32.gmra.mrb[0].mxu0 %v361
    %v526 = vpop.f32.mrb[0].mxu0
    %v527 = vadd.f32 %v437, %v526
    %v528 = vpop.f32.mrb[0].mxu0
    %v529 = vadd.f32 %v441, %v528
    %530 = vmatprep.mubr.f32.mxu0 0.0
    %531 = vmatmul.mubr.f32.gmra.mrb[0].mxu0 %v362
    %v532 = vpop.f32.mrb[0].mxu0
    %v533 = vadd.f32 %v437, %v532
    %v534 = vpop.f32.mrb[0].mxu0
    %v535 = vadd.f32 %v441, %v534
    %536 = vmatprep.mubr.f32.mxu0 0.0
    %537 = vmatmul.mubr.f32.gmra.mrb[0].mxu0 %v363
    %v538 = vpop.f32.mrb[0].mxu0
    %v539 = vadd.f32 %v437, %v538
    %v540 = vpop.f32.mrb[0].mxu0
    %v541 = vadd.f32 %v441, %v540
    %542 = vmatprep.mubr.f32.mxu0 0.0
    %543 = vmatmul.mubr.f32.gmra.mrb[0].mxu0 %v364
    %v544 = vpop.f32.mrb[0].mxu0
    %v545 = vadd.f32 %v437, %v544
    %v546 = vpop.f32.mrb[0].mxu0
    %v547 = vadd.f32 %v441, %v546
    %548 = vmatprep.mubr.f32.mxu0 0.0
    %549 = vmatmul.mubr.f32.gmra.mrb[0].mxu0 %v365
    %v550 = vpop.f32.mrb[0].mxu0
    %v551 = vadd.f32 %v437, %v550
    %v552 = vpop.f32.mrb[0].mxu0
    %v553 = vadd.f32 %v441, %v552
    %554 = vmatprep.mubr.f32.mxu0 0.0
    %555 = vmatmul.mubr.f32.gmra.mrb[0].mxu0 %v366
    %v556 = vpop.f32.mrb[0].mxu0
    %v557 = vadd.f32 %v437, %v556
    %v558 = vpop.f32.mrb[0].mxu0
    %v559 = vadd.f32 %v441, %v558
    %560 = vmatprep.mubr.f32.mxu0 0.0
    %561 = vmatmul.mubr.f32.gmra.mrb[0].mxu0 %v367
    %v562 = vpop.f32.mrb[0].mxu0
    %v563 = vadd.f32 %v437, %v562
    %v564 = vpop.f32.mrb[0].mxu0
    %v565 = vadd.f32 %v441, %v564
    %566 = vdwg.mxu0
    %567 = vmatprep.subr.mxu0 %v371
    %568 = vmatpush1.msra.mxu0 %v370
    %569 = vmatprep.subr.mxu0 %v375
    %570 = vmatpush1.msra.mxu0 %v374
    %571 = vmatprep.subr.mxu0 %v379
    %572 = vmatpush1.msra.mxu0 %v378
    %573 = vmatprep.subr.mxu0 %v383
    %574 = vmatpush1.msra.mxu0 %v382
    %575 = vmatprep.subr.mxu0 %v387
    %576 = vmatpush1.msra.mxu0 %v386
    %577 = vmatprep.subr.mxu0 %v391
    %578 = vmatpush1.msra.mxu0 %v390
    %579 = vmatprep.subr.mxu0 %v395
    %580 = vmatpush1.msra.mxu0 %v394
    %581 = vmatprep.subr.mxu0 %v399
    %582 = vmatpush1.msra.mxu0 %v398
    %583 = vmatprep.subr.mxu0 %v403
    %584 = vmatpush1.msra.mxu0 %v402
    %585 = vmatprep.subr.mxu0 %v407
    %586 = vmatpush1.msra.mxu0 %v406
    %587 = vmatprep.subr.mxu0 %v411
    %588 = vmatpush1.msra.mxu0 %v410
    %589 = vmatprep.subr.mxu0 %v415
    %590 = vmatpush1.msra.mxu0 %v414
    %591 = vmatprep.subr.mxu0 %v419
    %592 = vmatpush1.msra.mxu0 %v418
    %593 = vmatprep.subr.mxu0 %v423
    %594 = vmatpush1.msra.mxu0 %v422
    %595 = vmatprep.subr.mxu0 %v427
    %596 = vmatpush1.msra.mxu0 %v426
    %597 = vmatprep.subr.mxu0 %v431
    %598 = vmatpush1.msra.mxu0 %v430
    %599 = vmatprep.subr.mxu0 0.0
    %600 = vmatpush1.msra.mxu0 0.0
    %601 = vmatprep.subr.mxu0 0.0
    %602 = vmatpush1.msra.mxu0 0.0
    %603 = vmatprep.subr.mxu0 0.0
    %604 = vmatpush1.msra.mxu0 0.0
    %605 = vmatprep.subr.mxu0 0.0
    %606 = vmatpush1.msra.mxu0 0.0
    %607 = vmatprep.subr.mxu0 0.0
    %608 = vmatpush1.msra.mxu0 0.0
    %609 = vmatprep.subr.mxu0 0.0
    %610 = vmatpush1.msra.mxu0 0.0
    %611 = vmatprep.subr.mxu0 0.0
    %612 = vmatpush1.msra.mxu0 0.0
    %613 = vmatprep.subr.mxu0 0.0
    %614 = vmatpush1.msra.mxu0 0.0
    %615 = vmatprep.subr.mxu0 0.0
    %616 = vmatpush1.msra.mxu0 0.0
    %617 = vmatprep.subr.mxu0 0.0
    %618 = vmatpush1.msra.mxu0 0.0
    %619 = vmatprep.subr.mxu0 0.0
    %620 = vmatpush1.msra.mxu0 0.0
    %621 = vmatprep.subr.mxu0 0.0
    %622 = vmatpush1.msra.mxu0 0.0
    %623 = vmatprep.subr.mxu0 0.0
    %624 = vmatpush1.msra.mxu0 0.0
    %625 = vmatprep.subr.mxu0 0.0
    %626 = vmatpush1.msra.mxu0 0.0
    %627 = vmatprep.subr.mxu0 0.0
    %628 = vmatpush1.msra.mxu0 0.0
    %629 = vmatprep.subr.mxu0 0.0
    %630 = vmatpush1.msra.mxu0 0.0
    %631 = vmatprep.mubr.f32.mxu0 0.0
    %632 = vmatmul.mubr.f32.gmra.mrb[0].mxu0 %v360
    %v633 = vpop.f32.mrb[0].mxu0
    %v634 = vadd.f32 %v445, %v633
    %v635 = vpop.f32.mrb[0].mxu0
    %v636 = vadd.f32 %v449, %v635
    %637 = vmatprep.mubr.f32.mxu0 0.0
    %638 = vmatmul.mubr.f32.gmra.mrb[0].mxu0 %v361
    %v639 = vpop.f32.mrb[0].mxu0
    %v640 = vadd.f32 %v445, %v639
    %v641 = vpop.f32.mrb[0].mxu0
    %v642 = vadd.f32 %v449, %v641
    %643 = vmatprep.mubr.f32.mxu0 0.0
    %644 = vmatmul.mubr.f32.gmra.mrb[0].mxu0 %v362
    %v645 = vpop.f32.mrb[0].mxu0
    %v646 = vadd.f32 %v445, %v645
    %v647 = vpop.f32.mrb[0].mxu0
    %v648 = vadd.f32 %v449, %v647
    %649 = vmatprep.mubr.f32.mxu0 0.0
    %650 = vmatmul.mubr.f32.gmra.mrb[0].mxu0 %v363
    %v651 = vpop.f32.mrb[0].mxu0
    %v652 = vadd.f32 %v445, %v651
    %v653 = vpop.f32.mrb[0].mxu0
    %v654 = vadd.f32 %v449, %v653
    %655 = vmatprep.mubr.f32.mxu0 0.0
    %656 = vmatmul.mubr.f32.gmra.mrb[0].mxu0 %v364
    %v657 = vpop.f32.mrb[0].mxu0
    %v658 = vadd.f32 %v445, %v657
    %v659 = vpop.f32.mrb[0].mxu0
    %v660 = vadd.f32 %v449, %v659
    %661 = vmatprep.mubr.f32.mxu0 0.0
    %662 = vmatmul.mubr.f32.gmra.mrb[0].mxu0 %v365
    %v663 = vpop.f32.mrb[0].mxu0
    %v664 = vadd.f32 %v445, %v663
    %v665 = vpop.f32.mrb[0].mxu0
    %v666 = vadd.f32 %v449, %v665
    %667 = vmatprep.mubr.f32.mxu0 0.0
    %668 = vmatmul.mubr.f32.gmra.mrb[0].mxu0 %v366
    %v669 = vpop.f32.mrb[0].mxu0
    %v670 = vadd.f32 %v445, %v669
    %v671 = vpop.f32.mrb[0].mxu0
    %v672 = vadd.f32 %v449, %v671
    %673 = vmatprep.mubr.f32.mxu0 0.0
    %674 = vmatmul.mubr.f32.gmra.mrb[0].mxu0 %v367
    %v675 = vpop.f32.mrb[0].mxu0
    %v676 = vadd.f32 %v445, %v675
    %v677 = vpop.f32.mrb[0].mxu0
    %v678 = vadd.f32 %v449, %v677
    %679 = vdwg.mxu0
    %680 = vst [vmem:[#allocation11] sm:$0xff] %v521
    %681 = vst [vmem:[#allocation11 + $0x8] sm:$0xff] %v523
    %682 = vst [vmem:[#allocation11 + $0x10] sm:$0xff] %v634
    %683 = vst [vmem:[#allocation11 + $0x18] sm:$0xff] %v636
    %684 = vst [vmem:[#allocation11 + $0x20] sm:$0xff] %v527
    %685 = vst [vmem:[#allocation11 + $0x28] sm:$0xff] %v529
    %686 = vst [vmem:[#allocation11 + $0x30] sm:$0xff] %v640
    %687 = vst [vmem:[#allocation11 + $0x38] sm:$0xff] %v642
    %688 = vst [vmem:[#allocation11 + $0x40] sm:$0xff] %v533
    %689 = vst [vmem:[#allocation11 + $0x48] sm:$0xff] %v535
    %690 = vst [vmem:[#allocation11 + $0x50] sm:$0xff] %v646
    %691 = vst [vmem:[#allocation11 + $0x58] sm:$0xff] %v648
    %692 = vst [vmem:[#allocation11 + $0x60] sm:$0xff] %v539
    %693 = vst [vmem:[#allocation11 + $0x68] sm:$0xff] %v541
    %694 = vst [vmem:[#allocation11 + $0x70] sm:$0xff] %v652
    %695 = vst [vmem:[#allocation11 + $0x78] sm:$0xff] %v654
    %696 = vst [vmem:[#allocation11 + $0x80] sm:$0xff] %v545
    %697 = vst [vmem:[#allocation11 + $0x88] sm:$0xff] %v547
    %698 = vst [vmem:[#allocation11 + $0x90] sm:$0xff] %v658
    %699 = vst [vmem:[#allocation11 + $0x98] sm:$0xff] %v660
    %700 = vst [vmem:[#allocation11 + $0xa0] sm:$0xff] %v551
    %701 = vst [vmem:[#allocation11 + $0xa8] sm:$0xff] %v553
    %702 = vst [vmem:[#allocation11 + $0xb0] sm:$0xff] %v664
    %703 = vst [vmem:[#allocation11 + $0xb8] sm:$0xff] %v666
    %704 = vst [vmem:[#allocation11 + $0xc0] sm:$0xff] %v557
    %705 = vst [vmem:[#allocation11 + $0xc8] sm:$0xff] %v559
    %706 = vst [vmem:[#allocation11 + $0xd0] sm:$0xff] %v670
    %707 = vst [vmem:[#allocation11 + $0xd8] sm:$0xff] %v672
    %708 = vst [vmem:[#allocation11 + $0xe0] sm:$0xff] %v563
    %709 = vst [vmem:[#allocation11 + $0xe8] sm:$0xff] %v565
    %710 = vst [vmem:[#allocation11 + $0xf0] sm:$0xff] %v676
    %711 = vst [vmem:[#allocation11 + $0xf8] sm:$0xff] %v678
    // Predicated region
    $region50: #{tpu_custom_call.1} parent=1 // pred_check
      _
    $region51: #{tpu_custom_call.1} parent=1 // pred_check_branch
      %713 = sbr.rel (0) target = $region53
    $region52: #{tpu_custom_call.1} parent=1 // pred_region
      %s715 = ssub.s32 4096, 4096
      %716 = vsyncadd [#allocation4], %s715
      %s717 = sshll.u32 [#allocation11], 4
      %s718 = int_to_ptr.vmem [resolvable:$true] %s717
      %723 = dma.vmem_to_hbm [thread:$0]  %s718, 4096, %s7, [#allocation4], 512, 512, 32
    $region53: #{tpu_custom_call.1} parent=1 // pred_fallthru
      _
    // Predicated region
    $region54: #{tpu_custom_call.1} parent=1 // pred_check
      _
    $region55: #{tpu_custom_call.1} parent=1 // pred_check_branch
      %725 = sbr.rel (0) target = $region57
    $region56: #{tpu_custom_call.1} parent=1 // pred_region
      %726 = dma.done [#allocation4], 4096
    $region57: #{tpu_custom_call.1} parent=1 // pred_fallthru
      _
    %727 = vsyncpa [#allocation3], 1
    %728 = vsyncpa [#allocation6], 1
    %729 = vsyncpa [#allocation9], 1
    %730 = vsyncpa [#allocation4], 1

</llo_original>
